<compile_context>
chip_gen: v7x
topology: tpu7x:2x2x1
jax: 0.10.0
libtpu: 0.0.40
codegen_flags: <defaults>
</compile_context>

<pallas_src>
import functools
import math

import jax
import jax.numpy as jnp
from jax.experimental import pallas as pl
from jax.experimental.pallas import tpu as pltpu


def _anchor_linear_kernel(x_ref, w_ref, b_ref, o_ref, *, pooling_mode, d, C,
                          mm_dtype):
    """One grid step: pool a (tile_r, d, Wo, d*C) slab and project it.

    x_ref : (tile_r, d, Wo, d*C)  pooling windows, channels in the lane dim
    w_ref : (C, C_out)            mm_dtype weight, VMEM-resident across grid
    b_ref : (1, C_out)            f32 bias, VMEM-resident across grid
    o_ref : (tile_r, Wo, C_out)
    """
    tile_r, _, Wo, _ = x_ref.shape
    is_max = pooling_mode == "maxpool"

    # --- pooling: unrolled elementwise reduce over the d*d window taps ------
    # Every tap is a dense (tile_r, Wo, C) slab (lanes = C, sublanes = Wo), so
    # this is pure VPU work; no padded middle dim, no cross-lane shuffles.
    if is_max:
        acc = None
        for dy in range(d):
            row = x_ref[:, dy, :, :]                      # (tile_r, Wo, d*C)
            for dx in range(d):
                tap = row[:, :, dx * C:(dx + 1) * C]      # (tile_r, Wo, C)
                acc = tap if acc is None else jnp.maximum(acc, tap)
        pooled = acc
    else:
        acc = None
        for dy in range(d):
            row = x_ref[:, dy, :, :].astype(jnp.float32)  # accumulate in f32
            for dx in range(d):
                tap = row[:, :, dx * C:(dx + 1) * C]
                acc = tap if acc is None else acc + tap
        pooled = acc * (1.0 / (d * d))                    # avg stays in f32

    # --- projection on the MXU: (M, C) x (C, C_out), f32 accumulate ---------
    # reshape only merges/splits the major dims -> no lane relayout.
    lhs = pooled.reshape(tile_r * Wo, C).astype(mm_dtype)
    y = jnp.dot(lhs, w_ref[...], preferred_element_type=jnp.float32)
    y = y + b_ref[...]                                    # bias add in f32
    o_ref[...] = y.reshape(tile_r, Wo, -1).astype(o_ref.dtype)


def _pick_row_tile(R, Wo, d, C, itemsize):
    """Largest divisor of R with matmul M dim <= ~1024 rows and an input
    block that (double-buffered) stays comfortably inside scoped VMEM."""
    m_target = 1024
    vmem_cap = 4 * 1024 * 1024                # per-block cap (x2 for dbl buf)
    row_bytes = d * d * Wo * C * itemsize
    best = 1
    for t in range(1, R + 1):
        if R % t == 0 and t * Wo <= m_target and t * row_bytes <= vmem_cap:
            best = t
    return best


def anchor_linear(x, x_size, weight, bias, *, down_factor, pooling_mode,
                  use_bf16_matmul=True):
    """x: (B, H*W, C_in). Returns (B, H/d, W/d, C_out)."""
    B, L, C = x.shape
    H, W = x_size
    assert L == H * W, "input feature has wrong size"
    d = down_factor
    assert H % d == 0 and W % d == 0, "H, W must be divisible by down_factor"
    Ho, Wo = H // d, W // d
    C_out = weight.shape[1]
    R = B * Ho                                   # batch folded into M rows

    # Free reshape only (row-major regrouping, no transpose, no extra HBM
    # pass): (B, H*W, C) == (B, Ho, d, Wo, d, C) -> (B*Ho, d, Wo, d*C).
    xr = x.reshape(R, d, Wo, d * C)

    tile_r = _pick_row_tile(R, Wo, d, C, x.dtype.itemsize)
    grid = (R // tile_r,)

    mm_dtype = jnp.bfloat16 if use_bf16_matmul else jnp.float32
    w = weight.astype(mm_dtype)                       # bf16 weight: MXU-native
    b2 = bias.reshape(1, C_out).astype(jnp.float32)   # bias stays f32

    kernel = functools.partial(_anchor_linear_kernel,
                               pooling_mode=pooling_mode, d=d, C=C,
                               mm_dtype=mm_dtype)

    # Advisory cost hint: mem-bound streaming matmul.
    bytes_accessed = (xr.size * xr.dtype.itemsize
                      + w.size * w.dtype.itemsize
                      + b2.size * b2.dtype.itemsize
                      + R * Wo * C_out * x.dtype.itemsize)
    flops = 2 * R * Wo * C * C_out + R * Wo * C * (d * d - 1)

    out = pl.pallas_call(
        kernel,
        out_shape=jax.ShapeDtypeStruct((R, Wo, C_out), x.dtype),
        grid_spec=pltpu.PrefetchScalarGridSpec(
            num_scalar_prefetch=0,
            grid=grid,
            in_specs=[
                # Activation tile: last two dims (Wo, d*C) cover the full
                # array extent -> legal layout, dense minor dims.
                pl.BlockSpec((tile_r, d, Wo, d * C), lambda r: (r, 0, 0, 0)),
                # Weight / bias: same block every step -> stay VMEM-resident.
                pl.BlockSpec((C, C_out), lambda r: (0, 0)),
                pl.BlockSpec((1, C_out), lambda r: (0, 0)),
            ],
            out_specs=pl.BlockSpec((tile_r, Wo, C_out), lambda r: (r, 0, 0)),
        ),
        compiler_params=pltpu.CompilerParams(
            dimension_semantics=("parallel",),
        ),
        cost_estimate=pl.CostEstimate(flops=flops, transcendentals=0,
                                      bytes_accessed=bytes_accessed),
    )(xr, w, b2)

    return out.reshape(B, Ho, Wo, C_out)


def _reference(x, x_size, weight, bias, *, down_factor, pooling_mode):
    """Pure-JAX reference replicating the PyTorch AnchorLinear forward."""
    B, L, C = x.shape
    H, W = x_size
    d = down_factor
    Ho, Wo = H // d, W // d
    xb = x.reshape(B, H, W, C).reshape(B, Ho, d, Wo, d, C)
    if pooling_mode == "maxpool":
        pooled = jnp.max(xb, axis=(2, 4))
    else:
        pooled = jnp.mean(xb, axis=(2, 4))
    return jnp.einsum("bhwc,co->bhwo", pooled, weight) + bias


if __name__ == "__main__":
    B = 2
    C_in = 16
    C_out = 32
    H = W = 16

    key = jax.random.PRNGKey(0)
    k_x, k_w, k_b = jax.random.split(key, 3)

    x = jax.random.normal(k_x, (B, H * W, C_in), dtype=jnp.float32)

    # Deterministic nn.Linear-style init (uniform +/- 1/sqrt(fan_in)).
    bound = 1.0 / math.sqrt(C_in)
    # stored as (C_in, C_out), i.e. transpose of torch's (out, in) weight
    weight = jax.random.uniform(k_w, (C_in, C_out), jnp.float32, -bound, bound)
    bias = jax.random.uniform(k_b, (C_out,), jnp.float32, -bound, bound)

    configs = [
        # (pooling_mode, down_factor, use_bf16_matmul, tol)
        ("avgpool", 2, False, 1e-3),
        ("maxpool", 2, True, 2e-2),
        ("maxpool", 4, False, 1e-3),
        ("avgpool", 4, True, 2e-2),
    ]
    for pooling_mode, d, use_bf16, tol in configs:
        out = anchor_linear(
            x, (H, W), weight, bias,
            down_factor=d, pooling_mode=pooling_mode,
            use_bf16_matmul=use_bf16,
        )
        out = jax.block_until_ready(out)

        ref = _reference(
            x, (H, W), weight, bias,
            down_factor=d, pooling_mode=pooling_mode,
        )
        assert out.shape == (B, H // d, W // d, C_out), (pooling_mode, d)
        assert jnp.allclose(out, ref, atol=tol, rtol=tol), (pooling_mode, d)

    print("KERNEL_OK")
</pallas_src>

<mosaic_0001>
module attributes {stable_mosaic.version = 11 : i64} {
  func.func @_anchor_linear_kernel(%arg0: i32, %arg1: memref<16x2x8x32xf32, #tpu.memory_space<vmem>>, %arg2: memref<16x32xf32, #tpu.memory_space<vmem>>, %arg3: memref<1x32xf32, #tpu.memory_space<vmem>>, %arg4: memref<16x8x32xf32, #tpu.memory_space<vmem>>) attributes {dimension_semantics = [#tpu.dimension_semantics<parallel>], iteration_bounds = array<i64: 1>, scalar_prefetch = 0 : i64, scratch_operands = 0 : i64, tpu.core_type = #tpu.core_type<tc>, window_params = [{transform_indices = @transform_0, window_bounds = array<i64: 16, 2, 8, 32>}, {pipeline_mode = #tpu.pipeline_mode<synchronous>, transform_indices = @transform_1, window_bounds = array<i64: 16, 32>}, {pipeline_mode = #tpu.pipeline_mode<synchronous>, transform_indices = @transform_2, window_bounds = array<i64: 1, 32>}, {transform_indices = @transform_3, window_bounds = array<i64: 16, 8, 32>}]} {
    %c0 = arith.constant 0 : index
    %c0_0 = arith.constant 0 : index
    %c0_1 = arith.constant 0 : index
    %c0_2 = arith.constant 0 : index
    %0 = vector.load %arg1[%c0, %c0_0, %c0_1, %c0_2] : memref<16x2x8x32xf32, #tpu.memory_space<vmem>>, vector<16x1x8x32xf32>
    %1 = vector.shape_cast %0 : vector<16x1x8x32xf32> to vector<16x8x32xf32>
    %2 = vector.extract_strided_slice %1 {offsets = [0, 0, 0], sizes = [16, 8, 16], strides = [1, 1, 1]} : vector<16x8x32xf32> to vector<16x8x16xf32>
    %3 = vector.extract_strided_slice %1 {offsets = [0, 0, 16], sizes = [16, 8, 16], strides = [1, 1, 1]} : vector<16x8x32xf32> to vector<16x8x16xf32>
    %4 = arith.addf %2, %3 : vector<16x8x16xf32>
    %c0_3 = arith.constant 0 : index
    %c1 = arith.constant 1 : index
    %c0_4 = arith.constant 0 : index
    %c0_5 = arith.constant 0 : index
    %5 = vector.load %arg1[%c0_3, %c1, %c0_4, %c0_5] : memref<16x2x8x32xf32, #tpu.memory_space<vmem>>, vector<16x1x8x32xf32>
    %6 = vector.shape_cast %5 : vector<16x1x8x32xf32> to vector<16x8x32xf32>
    %7 = vector.extract_strided_slice %6 {offsets = [0, 0, 0], sizes = [16, 8, 16], strides = [1, 1, 1]} : vector<16x8x32xf32> to vector<16x8x16xf32>
    %8 = arith.addf %4, %7 : vector<16x8x16xf32>
    %9 = vector.extract_strided_slice %6 {offsets = [0, 0, 16], sizes = [16, 8, 16], strides = [1, 1, 1]} : vector<16x8x32xf32> to vector<16x8x16xf32>
    %10 = arith.addf %8, %9 : vector<16x8x16xf32>
    %cst = arith.constant 2.500000e-01 : f32
    %11 = vector.broadcast %cst : f32 to vector<16x8x16xf32>
    %12 = arith.mulf %10, %11 : vector<16x8x16xf32>
    %13 = vector.shape_cast %12 : vector<16x8x16xf32> to vector<128x16xf32>
    %c0_6 = arith.constant 0 : index
    %c0_7 = arith.constant 0 : index
    %14 = vector.load %arg2[%c0_6, %c0_7] : memref<16x32xf32, #tpu.memory_space<vmem>>, vector<16x32xf32>
    %cst_8 = arith.constant dense<0.000000e+00> : vector<128x32xf32>
    %15 = tpu.matmul %13, %14, %cst_8 {dimension_numbers = #tpu.dot_dimension_numbers<[1], [0], [0], [1], [0, 0, 1, 1], [], []>} : vector<128x16xf32>, vector<16x32xf32>, vector<128x32xf32> -> vector<128x32xf32>
    %c0_9 = arith.constant 0 : index
    %c0_10 = arith.constant 0 : index
    %16 = vector.load %arg3[%c0_9, %c0_10] : memref<1x32xf32, #tpu.memory_space<vmem>>, vector<1x32xf32>
    %17 = vector.broadcast %16 : vector<1x32xf32> to vector<128x32xf32>
    %18 = arith.addf %15, %17 : vector<128x32xf32>
    %19 = vector.shape_cast %18 : vector<128x32xf32> to vector<16x8x32xf32>
    %c0_11 = arith.constant 0 : index
    %c0_12 = arith.constant 0 : index
    %c0_13 = arith.constant 0 : index
    %20 = vector.load %arg4[%c0_11, %c0_12, %c0_13] : memref<16x8x32xf32, #tpu.memory_space<vmem>>, vector<16x8x32xf32>
    tpu.vector_store %arg4[%c0_11, %c0_12, %c0_13], %19 {strides = array<i32>} : memref<16x8x32xf32, #tpu.memory_space<vmem>>, vector<16x8x32xf32>,
    return
  }
  func.func @transform_0(%arg0: i32) -> (i32, i32, i32, i32) {
    %c0_i32 = arith.constant 0 : i32
    %c0_i32_0 = arith.constant 0 : i32
    %c0_i32_1 = arith.constant 0 : i32
    %c0_i32_2 = arith.constant 0 : i32
    return %arg0, %c0_i32, %c0_i32_0, %c0_i32_1 : i32, i32, i32, i32
  }
  func.func @transform_1(%arg0: i32) -> (i32, i32) {
    %c0_i32 = arith.constant 0 : i32
    %c0_i32_0 = arith.constant 0 : i32
    %c0_i32_1 = arith.constant 0 : i32
    return %c0_i32, %c0_i32_0 : i32, i32
  }
  func.func @transform_2(%arg0: i32) -> (i32, i32) {
    %c0_i32 = arith.constant 0 : i32
    %c0_i32_0 = arith.constant 0 : i32
    %c0_i32_1 = arith.constant 0 : i32
    return %c0_i32, %c0_i32_0 : i32, i32
  }
  func.func @transform_3(%arg0: i32) -> (i32, i32, i32) {
    %c0_i32 = arith.constant 0 : i32
    %c0_i32_0 = arith.constant 0 : i32
    %c0_i32_1 = arith.constant 0 : i32
    return %arg0, %c0_i32, %c0_i32_0 : i32, i32, i32
  }
}

</mosaic_0001>

<llo_original>
// kernel: tpu_custom_call.1
$region0: #{tpu_custom_call.1}
  #allocation0 [shape = 'u32[]', space=smem, size = 0x4, offset = 0x4, fixed_abs, tag = 'smem constant byte address 0x4 - core index']
  #allocation1 [shape = 'u32[144,128]{1,0:T(1,128)}', space=vmem, size = 0x12000, scoped, tag = 'internal scratch']
  %s0 = inlined_call_operand.hbm [shape: f32[16,2,8,32], index: 0, kind: input, shape index: {}]
  %s1 = inlined_call_operand.hbm [shape: f32[16,32], index: 1, kind: input, shape index: {}]
  %s2 = inlined_call_operand.vmem [shape: f32[1,32], index: 2, kind: input, shape index: {}]
  %s3 = inlined_call_operand.hbm [shape: f32[16,8,32], index: 3, kind: output, shape index: {}]
  %s4 = sld [smem:[#allocation0]]
  $region30: #{tpu_custom_call.1} parent=0
    _
  %s6 = ssub.s32 1, %s4
  %s7 = scalar_select 0, %s6, %s4
  $region1: #{tpu_custom_call.1} parent=0
    #allocation2 [shape = 'u8[131072]{0}', space=vmem, size = 0x20000, scoped, tag = 'input window, operand 0, single buffered']
    #allocation3 [shape = 's32[1]{0}', space=sflag, size = 0x4, scoped, tag = 'scoped memory for tpu_custom_call.1']
    #allocation4 [shape = 's32[1]{0}', space=sflag, size = 0x4, scoped, tag = 'scoped memory for tpu_custom_call.1']
    #allocation5 [shape = 'u8[8192]{0}', space=vmem, size = 0x2000, scoped, tag = 'input window, operand 1, single buffered']
    #allocation6 [shape = 's32[1]{0}', space=sflag, size = 0x4, scoped, tag = 'scoped memory for tpu_custom_call.1']
    #allocation7 [shape = 'u8[65536]{0}', space=vmem, size = 0x10000, scoped, tag = 'output window, operand 0, single buffered']
    %8 = vsyncpa [#allocation3], 0
    %9 = vsyncpa [#allocation6], 0
    %10 = vsyncpa [#allocation4], 0
    // Predicated region
    $region2: #{tpu_custom_call.1} parent=1 // pred_check
      _
    $region3: #{tpu_custom_call.1} parent=1 // pred_check_branch
      %12 = sbr.rel (0) target = $region5
    $region4: #{tpu_custom_call.1} parent=1 // pred_region
      %s14 = ssub.s32 4096, 4096
      %15 = vsyncadd [#allocation3], %s14
      %s16 = sshll.u32 [#allocation2], 4
      %s17 = int_to_ptr.vmem [resolvable:$true] %s16
      %22 = dma.hbm_to_vmem [thread:$0]  %s0, 4096, %s17, [#allocation3], 128, 128, 8
    $region5: #{tpu_custom_call.1} parent=1 // pred_fallthru
      _
    // Predicated region
    $region6: #{tpu_custom_call.1} parent=1 // pred_check
      _
    $region7: #{tpu_custom_call.1} parent=1 // pred_check_branch
      %24 = sbr.rel (0) target = $region9
    $region8: #{tpu_custom_call.1} parent=1 // pred_region
      %s26 = ssub.s32 256, 256
      %27 = vsyncadd [#allocation6], %s26
      %s28 = sshll.u32 [#allocation5], 4
      %s29 = int_to_ptr.vmem [resolvable:$true] %s28
      %34 = dma.hbm_to_vmem [thread:$0]  %s1, 256, %s29, [#allocation6], 128, 128, 8
    $region9: #{tpu_custom_call.1} parent=1 // pred_fallthru
      _
    // Predicated region
    $region10: #{tpu_custom_call.1} parent=1 // pred_check
      _
    $region11: #{tpu_custom_call.1} parent=1 // pred_check_branch
      %36 = sbr.rel (0) target = $region13
    $region12: #{tpu_custom_call.1} parent=1 // pred_region
      _
    $region13: #{tpu_custom_call.1} parent=1 // pred_fallthru
      _
    // Predicated region
    $region14: #{tpu_custom_call.1} parent=1 // pred_check
      _
    $region15: #{tpu_custom_call.1} parent=1 // pred_check_branch
      %38 = sbr.rel (0) target = $region17
    $region16: #{tpu_custom_call.1} parent=1 // pred_region
      %39 = dma.done [#allocation3], 4096
    $region17: #{tpu_custom_call.1} parent=1 // pred_fallthru
      _
    // Predicated region
    $region18: #{tpu_custom_call.1} parent=1 // pred_check
      _
    $region19: #{tpu_custom_call.1} parent=1 // pred_check_branch
      %41 = sbr.rel (0) target = $region21
    $region20: #{tpu_custom_call.1} parent=1 // pred_region
      %42 = dma.done [#allocation6], 256
    $region21: #{tpu_custom_call.1} parent=1 // pred_fallthru
      _
    %v43 = vld [vmem:[#allocation2] sm:$0xff]
    %v44 = vld [vmem:[#allocation2 + $0x10] sm:$0xff]
    %v45 = vld [vmem:[#allocation2 + $0x20] sm:$0xff]
    %v46 = vld [vmem:[#allocation2 + $0x30] sm:$0xff]
    %v47 = vld [vmem:[#allocation2 + $0x40] sm:$0xff]
    %v48 = vld [vmem:[#allocation2 + $0x50] sm:$0xff]
    %v49 = vld [vmem:[#allocation2 + $0x60] sm:$0xff]
    %v50 = vld [vmem:[#allocation2 + $0x70] sm:$0xff]
    %v51 = vld [vmem:[#allocation2 + $0x80] sm:$0xff]
    %v52 = vld [vmem:[#allocation2 + $0x90] sm:$0xff]
    %v53 = vld [vmem:[#allocation2 + $0xa0] sm:$0xff]
    %v54 = vld [vmem:[#allocation2 + $0xb0] sm:$0xff]
    %v55 = vld [vmem:[#allocation2 + $0xc0] sm:$0xff]
    %v56 = vld [vmem:[#allocation2 + $0xd0] sm:$0xff]
    %v57 = vld [vmem:[#allocation2 + $0xe0] sm:$0xff]
    %v58 = vld [vmem:[#allocation2 + $0xf0] sm:$0xff]
    %75 = vrot.lane.b32.xlu0 %v43, 112
    %v76 = vpop.permute.xlu0 %75
    %77 = vrot.lane.b32.xlu0 %v44, 112
    %v78 = vpop.permute.xlu0 %77
    %79 = vrot.lane.b32.xlu0 %v45, 112
    %v80 = vpop.permute.xlu0 %79
    %81 = vrot.lane.b32.xlu0 %v46, 112
    %v82 = vpop.permute.xlu0 %81
    %83 = vrot.lane.b32.xlu0 %v47, 112
    %v84 = vpop.permute.xlu0 %83
    %85 = vrot.lane.b32.xlu0 %v48, 112
    %v86 = vpop.permute.xlu0 %85
    %87 = vrot.lane.b32.xlu0 %v49, 112
    %v88 = vpop.permute.xlu0 %87
    %89 = vrot.lane.b32.xlu0 %v50, 112
    %v90 = vpop.permute.xlu0 %89
    %91 = vrot.lane.b32.xlu0 %v51, 112
    %v92 = vpop.permute.xlu0 %91
    %93 = vrot.lane.b32.xlu0 %v52, 112
    %v94 = vpop.permute.xlu0 %93
    %95 = vrot.lane.b32.xlu0 %v53, 112
    %v96 = vpop.permute.xlu0 %95
    %97 = vrot.lane.b32.xlu0 %v54, 112
    %v98 = vpop.permute.xlu0 %97
    %99 = vrot.lane.b32.xlu0 %v55, 112
    %v100 = vpop.permute.xlu0 %99
    %101 = vrot.lane.b32.xlu0 %v56, 112
    %v102 = vpop.permute.xlu0 %101
    %103 = vrot.lane.b32.xlu0 %v57, 112
    %v104 = vpop.permute.xlu0 %103
    %105 = vrot.lane.b32.xlu0 %v58, 112
    %v106 = vpop.permute.xlu0 %105
    %v123 = vadd.f32 %v43, %v76
    %v124 = vadd.f32 %v44, %v78
    %v125 = vadd.f32 %v45, %v80
    %v126 = vadd.f32 %v46, %v82
    %v127 = vadd.f32 %v47, %v84
    %v128 = vadd.f32 %v48, %v86
    %v129 = vadd.f32 %v49, %v88
    %v130 = vadd.f32 %v50, %v90
    %v131 = vadd.f32 %v51, %v92
    %v132 = vadd.f32 %v52, %v94
    %v133 = vadd.f32 %v53, %v96
    %v134 = vadd.f32 %v54, %v98
    %v135 = vadd.f32 %v55, %v100
    %v136 = vadd.f32 %v56, %v102
    %v137 = vadd.f32 %v57, %v104
    %v138 = vadd.f32 %v58, %v106
    %s139 = scalar_lea.vmem [#allocation2], 8
    %v140 = vld [vmem:[%s139] sm:$0xff]
    %v141 = vld [vmem:[%s139 + $0x10] sm:$0xff]
    %v142 = vld [vmem:[%s139 + $0x20] sm:$0xff]
    %v143 = vld [vmem:[%s139 + $0x30] sm:$0xff]
    %v144 = vld [vmem:[%s139 + $0x40] sm:$0xff]
    %v145 = vld [vmem:[%s139 + $0x50] sm:$0xff]
    %v146 = vld [vmem:[%s139 + $0x60] sm:$0xff]
    %v147 = vld [vmem:[%s139 + $0x70] sm:$0xff]
    %v148 = vld [vmem:[%s139 + $0x80] sm:$0xff]
    %v149 = vld [vmem:[%s139 + $0x90] sm:$0xff]
    %v150 = vld [vmem:[%s139 + $0xa0] sm:$0xff]
    %v151 = vld [vmem:[%s139 + $0xb0] sm:$0xff]
    %v152 = vld [vmem:[%s139 + $0xc0] sm:$0xff]
    %v153 = vld [vmem:[%s139 + $0xd0] sm:$0xff]
    %v154 = vld [vmem:[%s139 + $0xe0] sm:$0xff]
    %v155 = vld [vmem:[%s139 + $0xf0] sm:$0xff]
    %v156 = vadd.f32 %v123, %v140
    %v157 = vadd.f32 %v124, %v141
    %v158 = vadd.f32 %v125, %v142
    %v159 = vadd.f32 %v126, %v143
    %v160 = vadd.f32 %v127, %v144
    %v161 = vadd.f32 %v128, %v145
    %v162 = vadd.f32 %v129, %v146
    %v163 = vadd.f32 %v130, %v147
    %v164 = vadd.f32 %v131, %v148
    %v165 = vadd.f32 %v132, %v149
    %v166 = vadd.f32 %v133, %v150
    %v167 = vadd.f32 %v134, %v151
    %v168 = vadd.f32 %v135, %v152
    %v169 = vadd.f32 %v136, %v153
    %v170 = vadd.f32 %v137, %v154
    %v171 = vadd.f32 %v138, %v155
    %188 = vrot.lane.b32.xlu0 %v140, 112
    %v189 = vpop.permute.xlu0 %188
    %190 = vrot.lane.b32.xlu0 %v141, 112
    %v191 = vpop.permute.xlu0 %190
    %192 = vrot.lane.b32.xlu0 %v142, 112
    %v193 = vpop.permute.xlu0 %192
    %194 = vrot.lane.b32.xlu0 %v143, 112
    %v195 = vpop.permute.xlu0 %194
    %196 = vrot.lane.b32.xlu0 %v144, 112
    %v197 = vpop.permute.xlu0 %196
    %198 = vrot.lane.b32.xlu0 %v145, 112
    %v199 = vpop.permute.xlu0 %198
    %200 = vrot.lane.b32.xlu0 %v146, 112
    %v201 = vpop.permute.xlu0 %200
    %202 = vrot.lane.b32.xlu0 %v147, 112
    %v203 = vpop.permute.xlu0 %202
    %204 = vrot.lane.b32.xlu0 %v148, 112
    %v205 = vpop.permute.xlu0 %204
    %206 = vrot.lane.b32.xlu0 %v149, 112
    %v207 = vpop.permute.xlu0 %206
    %208 = vrot.lane.b32.xlu0 %v150, 112
    %v209 = vpop.permute.xlu0 %208
    %210 = vrot.lane.b32.xlu0 %v151, 112
    %v211 = vpop.permute.xlu0 %210
    %212 = vrot.lane.b32.xlu0 %v152, 112
    %v213 = vpop.permute.xlu0 %212
    %214 = vrot.lane.b32.xlu0 %v153, 112
    %v215 = vpop.permute.xlu0 %214
    %216 = vrot.lane.b32.xlu0 %v154, 112
    %v217 = vpop.permute.xlu0 %216
    %218 = vrot.lane.b32.xlu0 %v155, 112
    %v219 = vpop.permute.xlu0 %218
    %v236 = vadd.f32 %v156, %v189
    %v237 = vadd.f32 %v157, %v191
    %v238 = vadd.f32 %v158, %v193
    %v239 = vadd.f32 %v159, %v195
    %v240 = vadd.f32 %v160, %v197
    %v241 = vadd.f32 %v161, %v199
    %v242 = vadd.f32 %v162, %v201
    %v243 = vadd.f32 %v163, %v203
    %v244 = vadd.f32 %v164, %v205
    %v245 = vadd.f32 %v165, %v207
    %v246 = vadd.f32 %v166, %v209
    %v247 = vadd.f32 %v167, %v211
    %v248 = vadd.f32 %v168, %v213
    %v249 = vadd.f32 %v169, %v215
    %v250 = vadd.f32 %v170, %v217
    %v251 = vadd.f32 %v171, %v219
    %v252 = vmul.f32 %v236, 0.25
    %v253 = vmul.f32 %v237, 0.25
    %v254 = vmul.f32 %v238, 0.25
    %v255 = vmul.f32 %v239, 0.25
    %v256 = vmul.f32 %v240, 0.25
    %v257 = vmul.f32 %v241, 0.25
    %v258 = vmul.f32 %v242, 0.25
    %v259 = vmul.f32 %v243, 0.25
    %v260 = vmul.f32 %v244, 0.25
    %v261 = vmul.f32 %v245, 0.25
    %v262 = vmul.f32 %v246, 0.25
    %v263 = vmul.f32 %v247, 0.25
    %v264 = vmul.f32 %v248, 0.25
    %v265 = vmul.f32 %v249, 0.25
    %v266 = vmul.f32 %v250, 0.25
    %v267 = vmul.f32 %v251, 0.25
    %v268 = vld [vmem:[#allocation5] sm:$0xff]
    %v269 = vld [vmem:[#allocation5 + $0x8] sm:$0xff]
    %v270 = vld [vmem:[%s2] sm:$0x1]
    %v272 = vlaneseq
    %v273 = vshrl.u32 %v272, 7
    %v274 = vsub.s32 0, %v273
    %v275 = vrot.slane %v270, %v274
    %vm277 = vcmask 130048
    %v279 = vsel %vm277, %v252, 0
    %v282 = vsel %vm277, %v253, 0
    %v285 = vsel %vm277, %v254, 0
    %v288 = vsel %vm277, %v255, 0
    %v291 = vsel %vm277, %v256, 0
    %v294 = vsel %vm277, %v257, 0
    %v297 = vsel %vm277, %v258, 0
    %v300 = vsel %vm277, %v259, 0
    %v303 = vsel %vm277, %v260, 0
    %v306 = vsel %vm277, %v261, 0
    %v309 = vsel %vm277, %v262, 0
    %v312 = vsel %vm277, %v263, 0
    %v315 = vsel %vm277, %v264, 0
    %v318 = vsel %vm277, %v265, 0
    %v321 = vsel %vm277, %v266, 0
    %v324 = vsel %vm277, %v267, 0
    %326 = vmatprep.subr.mxu0 0.0
    %327 = vmatpush1.msra.mxu0 %v268
    %328 = vmatprep.subr.mxu0 0.0
    %329 = vmatpush1.msra.mxu0 %v269
    %330 = vmatprep.subr.mxu0 0.0
    %331 = vmatpush1.msra.mxu0 0.0
    %332 = vmatprep.subr.mxu0 0.0
    %333 = vmatpush1.msra.mxu0 0.0
    %334 = vmatprep.subr.mxu0 0.0
    %335 = vmatpush1.msra.mxu0 0.0
    %336 = vmatprep.subr.mxu0 0.0
    %337 = vmatpush1.msra.mxu0 0.0
    %338 = vmatprep.subr.mxu0 0.0
    %339 = vmatpush1.msra.mxu0 0.0
    %340 = vmatprep.subr.mxu0 0.0
    %341 = vmatpush1.msra.mxu0 0.0
    %342 = vmatprep.subr.mxu0 0.0
    %343 = vmatpush1.msra.mxu0 0.0
    %344 = vmatprep.subr.mxu0 0.0
    %345 = vmatpush1.msra.mxu0 0.0
    %346 = vmatprep.subr.mxu0 0.0
    %347 = vmatpush1.msra.mxu0 0.0
    %348 = vmatprep.subr.mxu0 0.0
    %349 = vmatpush1.msra.mxu0 0.0
    %350 = vmatprep.subr.mxu0 0.0
    %351 = vmatpush1.msra.mxu0 0.0
    %352 = vmatprep.subr.mxu0 0.0
    %353 = vmatpush1.msra.mxu0 0.0
    %354 = vmatprep.subr.mxu0 0.0
    %355 = vmatpush1.msra.mxu0 0.0
    %356 = vmatprep.subr.mxu0 0.0
    %357 = vmatpush1.msra.mxu0 0.0
    %358 = vmatprep.subr.mxu0 0.0
    %359 = vmatpush1.msra.mxu0 0.0
    %360 = vmatprep.subr.mxu0 0.0
    %361 = vmatpush1.msra.mxu0 0.0
    %362 = vmatprep.subr.mxu0 0.0
    %363 = vmatpush1.msra.mxu0 0.0
    %364 = vmatprep.subr.mxu0 0.0
    %365 = vmatpush1.msra.mxu0 0.0
    %366 = vmatprep.subr.mxu0 0.0
    %367 = vmatpush1.msra.mxu0 0.0
    %368 = vmatprep.subr.mxu0 0.0
    %369 = vmatpush1.msra.mxu0 0.0
    %370 = vmatprep.subr.mxu0 0.0
    %371 = vmatpush1.msra.mxu0 0.0
    %372 = vmatprep.subr.mxu0 0.0
    %373 = vmatpush1.msra.mxu0 0.0
    %374 = vmatprep.subr.mxu0 0.0
    %375 = vmatpush1.msra.mxu0 0.0
    %376 = vmatprep.subr.mxu0 0.0
    %377 = vmatpush1.msra.mxu0 0.0
    %378 = vmatprep.subr.mxu0 0.0
    %379 = vmatpush1.msra.mxu0 0.0
    %380 = vmatprep.subr.mxu0 0.0
    %381 = vmatpush1.msra.mxu0 0.0
    %382 = vmatprep.subr.mxu0 0.0
    %383 = vmatpush1.msra.mxu0 0.0
    %384 = vmatprep.subr.mxu0 0.0
    %385 = vmatpush1.msra.mxu0 0.0
    %386 = vmatprep.subr.mxu0 0.0
    %387 = vmatpush1.msra.mxu0 0.0
    %388 = vmatprep.subr.mxu0 0.0
    %389 = vmatpush1.msra.mxu0 0.0
    %390 = vmatprep.mubr.f32.mxu0 0.0
    %391 = vmatmul.mubr.f32.gmra.mrb[0].mxu0 %v279
    %v392 = vpop.f32.mrb[0].mxu0
    %v393 = vadd.f32 %v275, %v392
    %v394 = vpop.f32.mrb[0].mxu0
    %395 = vmatprep.mubr.f32.mxu0 0.0
    %396 = vmatmul.mubr.f32.gmra.mrb[0].mxu0 %v282
    %v397 = vpop.f32.mrb[0].mxu0
    %v398 = vadd.f32 %v275, %v397
    %v399 = vpop.f32.mrb[0].mxu0
    %400 = vmatprep.mubr.f32.mxu0 0.0
    %401 = vmatmul.mubr.f32.gmra.mrb[0].mxu0 %v285
    %v402 = vpop.f32.mrb[0].mxu0
    %v403 = vadd.f32 %v275, %v402
    %v404 = vpop.f32.mrb[0].mxu0
    %405 = vmatprep.mubr.f32.mxu0 0.0
    %406 = vmatmul.mubr.f32.gmra.mrb[0].mxu0 %v288
    %v407 = vpop.f32.mrb[0].mxu0
    %v408 = vadd.f32 %v275, %v407
    %v409 = vpop.f32.mrb[0].mxu0
    %410 = vmatprep.mubr.f32.mxu0 0.0
    %411 = vmatmul.mubr.f32.gmra.mrb[0].mxu0 %v291
    %v412 = vpop.f32.mrb[0].mxu0
    %v413 = vadd.f32 %v275, %v412
    %v414 = vpop.f32.mrb[0].mxu0
    %415 = vmatprep.mubr.f32.mxu0 0.0
    %416 = vmatmul.mubr.f32.gmra.mrb[0].mxu0 %v294
    %v417 = vpop.f32.mrb[0].mxu0
    %v418 = vadd.f32 %v275, %v417
    %v419 = vpop.f32.mrb[0].mxu0
    %420 = vmatprep.mubr.f32.mxu0 0.0
    %421 = vmatmul.mubr.f32.gmra.mrb[0].mxu0 %v297
    %v422 = vpop.f32.mrb[0].mxu0
    %v423 = vadd.f32 %v275, %v422
    %v424 = vpop.f32.mrb[0].mxu0
    %425 = vmatprep.mubr.f32.mxu0 0.0
    %426 = vmatmul.mubr.f32.gmra.mrb[0].mxu0 %v300
    %v427 = vpop.f32.mrb[0].mxu0
    %v428 = vadd.f32 %v275, %v427
    %v429 = vpop.f32.mrb[0].mxu0
    %430 = vmatprep.mubr.f32.mxu0 0.0
    %431 = vmatmul.mubr.f32.gmra.mrb[0].mxu0 %v303
    %v432 = vpop.f32.mrb[0].mxu0
    %v433 = vadd.f32 %v275, %v432
    %v434 = vpop.f32.mrb[0].mxu0
    %435 = vmatprep.mubr.f32.mxu0 0.0
    %436 = vmatmul.mubr.f32.gmra.mrb[0].mxu0 %v306
    %v437 = vpop.f32.mrb[0].mxu0
    %v438 = vadd.f32 %v275, %v437
    %v439 = vpop.f32.mrb[0].mxu0
    %440 = vmatprep.mubr.f32.mxu0 0.0
    %441 = vmatmul.mubr.f32.gmra.mrb[0].mxu0 %v309
    %v442 = vpop.f32.mrb[0].mxu0
    %v443 = vadd.f32 %v275, %v442
    %v444 = vpop.f32.mrb[0].mxu0
    %445 = vmatprep.mubr.f32.mxu0 0.0
    %446 = vmatmul.mubr.f32.gmra.mrb[0].mxu0 %v312
    %v447 = vpop.f32.mrb[0].mxu0
    %v448 = vadd.f32 %v275, %v447
    %v449 = vpop.f32.mrb[0].mxu0
    %450 = vmatprep.mubr.f32.mxu0 0.0
    %451 = vmatmul.mubr.f32.gmra.mrb[0].mxu0 %v315
    %v452 = vpop.f32.mrb[0].mxu0
    %v453 = vadd.f32 %v275, %v452
    %v454 = vpop.f32.mrb[0].mxu0
    %455 = vmatprep.mubr.f32.mxu0 0.0
    %456 = vmatmul.mubr.f32.gmra.mrb[0].mxu0 %v318
    %v457 = vpop.f32.mrb[0].mxu0
    %v458 = vadd.f32 %v275, %v457
    %v459 = vpop.f32.mrb[0].mxu0
    %460 = vmatprep.mubr.f32.mxu0 0.0
    %461 = vmatmul.mubr.f32.gmra.mrb[0].mxu0 %v321
    %v462 = vpop.f32.mrb[0].mxu0
    %v463 = vadd.f32 %v275, %v462
    %v464 = vpop.f32.mrb[0].mxu0
    %465 = vmatprep.mubr.f32.mxu0 0.0
    %466 = vmatmul.mubr.f32.gmra.mrb[0].mxu0 %v324
    %v467 = vpop.f32.mrb[0].mxu0
    %v468 = vadd.f32 %v275, %v467
    %v469 = vpop.f32.mrb[0].mxu0
    %470 = vdwg.mxu0
    %vm471 = vcmask 261120
    %472 = vst.msk [vmem:[#allocation7] sm:$0xff] %vm471, %v393
    %473 = vst.msk [vmem:[#allocation7 + $0x8] sm:$0xff] %vm471, %v398
    %474 = vst.msk [vmem:[#allocation7 + $0x10] sm:$0xff] %vm471, %v403
    %475 = vst.msk [vmem:[#allocation7 + $0x18] sm:$0xff] %vm471, %v408
    %476 = vst.msk [vmem:[#allocation7 + $0x20] sm:$0xff] %vm471, %v413
    %477 = vst.msk [vmem:[#allocation7 + $0x28] sm:$0xff] %vm471, %v418
    %478 = vst.msk [vmem:[#allocation7 + $0x30] sm:$0xff] %vm471, %v423
    %479 = vst.msk [vmem:[#allocation7 + $0x38] sm:$0xff] %vm471, %v428
    %480 = vst.msk [vmem:[#allocation7 + $0x40] sm:$0xff] %vm471, %v433
    %481 = vst.msk [vmem:[#allocation7 + $0x48] sm:$0xff] %vm471, %v438
    %482 = vst.msk [vmem:[#allocation7 + $0x50] sm:$0xff] %vm471, %v443
    %483 = vst.msk [vmem:[#allocation7 + $0x58] sm:$0xff] %vm471, %v448
    %484 = vst.msk [vmem:[#allocation7 + $0x60] sm:$0xff] %vm471, %v453
    %485 = vst.msk [vmem:[#allocation7 + $0x68] sm:$0xff] %vm471, %v458
    %486 = vst.msk [vmem:[#allocation7 + $0x70] sm:$0xff] %vm471, %v463
    %487 = vst.msk [vmem:[#allocation7 + $0x78] sm:$0xff] %vm471, %v468
    // Predicated region
    $region22: #{tpu_custom_call.1} parent=1 // pred_check
      _
    $region23: #{tpu_custom_call.1} parent=1 // pred_check_branch
      %489 = sbr.rel (0) target = $region25
    $region24: #{tpu_custom_call.1} parent=1 // pred_region
      %s491 = ssub.s32 2048, 2048
      %492 = vsyncadd [#allocation4], %s491
      %s493 = sshll.u32 [#allocation7], 4
      %s494 = int_to_ptr.vmem [resolvable:$true] %s493
      %499 = dma.vmem_to_hbm [thread:$0]  %s494, 2048, %s3, [#allocation4], 128, 128, 8
    $region25: #{tpu_custom_call.1} parent=1 // pred_fallthru
      _
    // Predicated region
    $region26: #{tpu_custom_call.1} parent=1 // pred_check
      _
    $region27: #{tpu_custom_call.1} parent=1 // pred_check_branch
      %501 = sbr.rel (0) target = $region29
    $region28: #{tpu_custom_call.1} parent=1 // pred_region
      %502 = dma.done [#allocation4], 2048
    $region29: #{tpu_custom_call.1} parent=1 // pred_fallthru
      _
    %503 = vsyncpa [#allocation3], 1
    %504 = vsyncpa [#allocation6], 1
    %505 = vsyncpa [#allocation4], 1

</llo_original>
